<compile_context>
chip_gen: v7x
topology: tpu7x:2x2x1
jax: 0.10.0
libtpu: 0.0.40
codegen_flags: <defaults>
</compile_context>

<pallas_src>
import math
import functools

import jax
import jax.numpy as jnp
from jax.experimental import pallas as pl
from jax.experimental.pallas import tpu as pltpu


_NEG_INF = -1e30  # finite "-inf": keeps the online softmax free of inf-inf NaN paths


# ----------------------------- kernel 1: fused projection ----------------------------

def _proj_kernel(x_ref, w_ref, b_ref, qk_ref, v_ref, *, ko, qk_scale):
    """Fused keyProject / valueProject for one (batch, seq-tile) block.

    x_ref : (1, blk, H)   f32 hidden states
    w_ref : (H, Ko+Vo)    bf16  [Wk | Wv]   (grid-invariant)
    b_ref : (1, Ko+Vo)    f32   [bk | bv]   (grid-invariant)
    qk_ref: (1, blk, Ko)  bf16 out  (pre-scaled by key_dim**-0.25)
    v_ref : (1, blk, Vo)  bf16 out
    """
    x = x_ref[0].astype(jnp.bfloat16)  # cast activations in-kernel (weights pre-cast)
    y = jnp.dot(x, w_ref[...], preferred_element_type=jnp.float32) + b_ref[...]
    # Fold the 1/sqrt(key_dim) score scale into the shared q/k slab once.
    qk_ref[0] = (y[:, :ko] * qk_scale).astype(qk_ref.dtype)   # lane-dense store
    v_ref[0] = y[:, ko:].astype(v_ref.dtype)                  # lane-dense store
    # TODO(synk): for very large hidden_dim (weights >= ~8-16 MiB) add an
    # "arbitrary" H-tile grid axis + f32 accumulator to keep the weight block
    # bounded on v7x's 64 MiB VMEM.


# ----------------------------- kernel 2: flash attention -----------------------------

def _flash_attn_kernel(q_ref, k_ref, v_ref, o_ref, m_sc, l_sc, acc_sc, qh_sc, *,
                       head_num, key_dim, value_dim, seq_len, needs_mask):
    """Flash attention for one (batch, q-tile); the innermost axis loops KV tiles.

    q_ref : (1, blk_q,  Ko) bf16  (pre-scaled keyProject slab, q-tile)
    k_ref : (1, blk_kv, Ko) bf16  (same tensor, kv-tile)
    v_ref : (1, blk_kv, Vo) bf16
    o_ref : (1, blk_q,  Vo)       heads merged -> single lane-dense store

    NOTE: the resident accumulators rely on the KV axis being the *innermost*
    grid axis and marked "arbitrary" — do not reorder the grid.
    """
    ki = pl.program_id(2)
    nh, kd, vd = head_num, key_dim, value_dim

    def split_heads(slab, d):
        # (blk, nh*d) -> (nh, blk, d): static lane slices + leading-dim stack.
        # VMEM-only relayout, overlapped with MXU; no HBM layout plumbing.
        return jnp.stack([slab[:, h * d:(h + 1) * d] for h in range(nh)], axis=0)

    @pl.when(ki == 0)
    def _():
        m_sc[...] = jnp.full_like(m_sc, _NEG_INF)
        l_sc[...] = jnp.zeros_like(l_sc)
        acc_sc[...] = jnp.zeros_like(acc_sc)
        qh_sc[...] = split_heads(q_ref[0], kd)     # cache split q for all KV steps

    kh = split_heads(k_ref[0], kd)                 # (nh, blk_kv, kd) bf16
    vh = split_heads(v_ref[0], vd)                 # (nh, blk_kv, vd) bf16
    blk_kv = kh.shape[1]

    # All heads in one batched MXU contraction, f32 accumulation.
    s = jnp.einsum("hqd,hkd->hqk", qh_sc[...], kh,
                   preferred_element_type=jnp.float32)

    if needs_mask:  # only traced when S was padded; vanishes when S % blk_kv == 0
        col = ki * blk_kv + jax.lax.broadcasted_iota(jnp.int32, (1, 1, blk_kv), 2)
        s = jnp.where(col < seq_len, s, _NEG_INF)

    # Online softmax: max/sum/rescale in f32; exp + p@v in bf16 (EUP / MXU).
    m_prev = m_sc[...]
    m_new = jnp.maximum(m_prev, jnp.max(s, axis=-1, keepdims=True))
    alpha = jnp.exp(m_prev - m_new)
    p = jnp.exp((s - m_new).astype(jnp.bfloat16))            # bf16 exp, bf16 probs
    l_sc[...] = alpha * l_sc[...] + jnp.sum(p.astype(jnp.float32),
                                            axis=-1, keepdims=True)
    acc_sc[...] = alpha * acc_sc[...] + jnp.einsum(
        "hqk,hkd->hqd", p, vh, preferred_element_type=jnp.float32)
    m_sc[...] = m_new

    @pl.when(ki == pl.num_programs(2) - 1)
    def _():
        inv_l = pl.reciprocal(l_sc[...], approx=True)        # EUP slot, ~free
        acc = acc_sc[...] * inv_l                            # (nh, blk_q, vd) f32
        # Merge heads with a lane concat -> one lane-dense (blk_q, nh*vd) store.
        merged = jnp.concatenate([acc[h] for h in range(nh)], axis=-1)
        o_ref[0] = merged.astype(o_ref.dtype)


# ----------------------------------- wrapper -----------------------------------------

def multihead_attention(hidden_states, wk, bk, wv, bv, *,
                        head_num, key_dim, value_dim,
                        max_block_q=256, max_block_kv=512,
                        vmem_limit_bytes=48 * 1024 * 1024):
    """hidden_states [B, S, H] f32 -> [B, S, value_dim * head_num] f32.

    Matches MultiheadAttention.forward(hidden_states, attention_mask=None).

    Tile-size guidance (per-generation): on v5e/v6e (128 MiB VMEM) raise
    max_block_q/max_block_kv to 512 and vmem_limit_bytes to ~96 MiB; on v7x
    (64 MiB VMEM) keep blk_q modest, prefer growing blk_kv, and cap
    vmem_limit_bytes around 48-56 MiB.
    """
    B, S, H = hidden_states.shape
    Ko = key_dim * head_num
    Vo = value_dim * head_num
    assert wk.shape == (H, Ko) and wv.shape == (H, Vo)
    assert bk.shape == (Ko,) and bv.shape == (Vo,)
    assert max_block_q % 128 == 0 and max_block_kv % 128 == 0

    def _round_up(a, m):
        return ((a + m - 1) // m) * m

    def _pick_block(s_pad, cap):
        # largest multiple of 128 that divides s_pad and is <= cap
        best, d = 128, 128
        while d <= min(cap, s_pad):
            if s_pad % d == 0:
                best = d
            d += 128
        return best

    # Pad the sequence to a multiple of 128 (lane/sublane friendly tiles) and
    # pick decoupled q / kv tiles (blk_kv >= blk_q: fewer online-softmax rescales).
    S_pad = _round_up(S, 128)
    blk_q = _pick_block(S_pad, max_block_q)
    blk_kv = _pick_block(S_pad, max_block_kv)
    n_q = S_pad // blk_q
    n_kv = S_pad // blk_kv

    x = hidden_states
    if S_pad != S:
        x = jnp.pad(x, ((0, 0), (0, S_pad - S), (0, 0)))

    # Grid-invariant weights: fuse [Wk | Wv] and pre-cast to bf16 once in the
    # wrapper (one MXU RHS, one-time cast).  Biases stay f32 for the f32 bias add.
    w_kv = jnp.concatenate([wk, wv], axis=1).astype(jnp.bfloat16)            # (H, Ko+Vo)
    b_kv = jnp.concatenate([bk, bv], axis=0).reshape(1, Ko + Vo).astype(jnp.float32)

    # ---- kernel 1: fused key/value projection ---------------------------------------
    qk, v = pl.pallas_call(
        functools.partial(_proj_kernel, ko=Ko, qk_scale=float(key_dim) ** -0.25),
        out_shape=(jax.ShapeDtypeStruct((B, S_pad, Ko), jnp.bfloat16),
                   jax.ShapeDtypeStruct((B, S_pad, Vo), jnp.bfloat16)),
        grid_spec=pltpu.PrefetchScalarGridSpec(
            num_scalar_prefetch=0,
            grid=(B, n_q),
            in_specs=[
                pl.BlockSpec((1, blk_q, H), lambda b, si: (b, si, 0)),   # hidden_states
                pl.BlockSpec((H, Ko + Vo), lambda b, si: (0, 0)),        # [Wk|Wv] bf16
                pl.BlockSpec((1, Ko + Vo), lambda b, si: (0, 0)),        # [bk|bv] f32
            ],
            out_specs=[
                pl.BlockSpec((1, blk_q, Ko), lambda b, si: (b, si, 0)),
                pl.BlockSpec((1, blk_q, Vo), lambda b, si: (b, si, 0)),
            ],
        ),
        compiler_params=pltpu.CompilerParams(
            dimension_semantics=("parallel", "parallel"),
            vmem_limit_bytes=vmem_limit_bytes),
    )(x, w_kv, b_kv)

    # ---- kernel 2: flash attention (KV axis innermost + "arbitrary") ----------------
    out = pl.pallas_call(
        functools.partial(_flash_attn_kernel,
                          head_num=head_num, key_dim=key_dim, value_dim=value_dim,
                          seq_len=S, needs_mask=(S_pad != S)),
        out_shape=jax.ShapeDtypeStruct((B, S_pad, Vo), hidden_states.dtype),
        grid_spec=pltpu.PrefetchScalarGridSpec(
            num_scalar_prefetch=0,
            grid=(B, n_q, n_kv),
            in_specs=[
                pl.BlockSpec((1, blk_q, Ko), lambda b, qi, ki: (b, qi, 0)),   # query slab
                pl.BlockSpec((1, blk_kv, Ko), lambda b, qi, ki: (b, ki, 0)),  # key slab (same tensor)
                pl.BlockSpec((1, blk_kv, Vo), lambda b, qi, ki: (b, ki, 0)),  # value slab
            ],
            out_specs=pl.BlockSpec((1, blk_q, Vo), lambda b, qi, ki: (b, qi, 0)),
            scratch_shapes=[
                pltpu.VMEM((head_num, blk_q, 1), jnp.float32),          # running max
                pltpu.VMEM((head_num, blk_q, 1), jnp.float32),          # running sum
                pltpu.VMEM((head_num, blk_q, value_dim), jnp.float32),  # output accumulator
                pltpu.VMEM((head_num, blk_q, key_dim), jnp.bfloat16),   # cached split q
            ],
        ),
        compiler_params=pltpu.CompilerParams(
            dimension_semantics=("parallel", "parallel", "arbitrary"),
            vmem_limit_bytes=vmem_limit_bytes),
    )(qk, qk, v)

    if S_pad != S:
        out = out[:, :S, :]
    # TODO(synk): XSoftmax masked path (attention_mask is not None) not wired in;
    # only the default attention_mask=None forward is implemented.
    return out


# ----------------------------------- reference ---------------------------------------

def _reference(hidden_states, wk, bk, wv, bv, *, head_num, key_dim, value_dim):
    """Pure-JAX reference mirroring the PyTorch forward (attention_mask=None)."""
    B, S, H = hidden_states.shape
    qk = hidden_states @ wk + bk          # (B, S, K*nh)
    v = hidden_states @ wv + bv           # (B, S, V*nh)

    def split(t, d):
        return t.reshape(B, S, head_num, d).transpose(0, 2, 1, 3)  # (B, nh, S, d)

    q = split(qk, key_dim)
    k = split(qk, key_dim)
    val = split(v, value_dim)
    scores = jnp.einsum("bhqd,bhkd->bhqk", q, k) / math.sqrt(key_dim)
    probs = jax.nn.softmax(scores, axis=-1)
    out = jnp.einsum("bhqk,bhkd->bhqd", probs, val)
    return out.transpose(0, 2, 1, 3).reshape(B, S, value_dim * head_num)


if __name__ == "__main__":
    # Small shapes consistent with the module.
    B, S, H = 2, 8, 32
    head_num = 4
    head_dim = H // head_num          # key_dim = value_dim = head_dim = 8
    key_dim = head_dim
    value_dim = head_dim

    key = jax.random.PRNGKey(0)
    kx, kwk, kbk, kwv, kbv = jax.random.split(key, 5)

    hidden_states = jax.random.normal(kx, (B, S, H), dtype=jnp.float32)

    # keyProject / valueProject: Linear(H, d*head_num), xavier_normal_ weights.
    Ko = key_dim * head_num
    Vo = value_dim * head_num
    xavier_std_k = math.sqrt(2.0 / (H + Ko))
    xavier_std_v = math.sqrt(2.0 / (H + Vo))
    # stored as (in, out) = weight.T relative to PyTorch's (out, in)
    wk = xavier_std_k * jax.random.normal(kwk, (H, Ko), dtype=jnp.float32)
    wv = xavier_std_v * jax.random.normal(kwv, (H, Vo), dtype=jnp.float32)
    bound = 1.0 / math.sqrt(H)
    bk = jax.random.uniform(kbk, (Ko,), minval=-bound, maxval=bound, dtype=jnp.float32)
    bv = jax.random.uniform(kbv, (Vo,), minval=-bound, maxval=bound, dtype=jnp.float32)

    out = multihead_attention(hidden_states, wk, bk, wv, bv,
                              head_num=head_num, key_dim=key_dim, value_dim=value_dim)
    out = jax.block_until_ready(out)

    ref = _reference(hidden_states, wk, bk, wv, bv,
                     head_num=head_num, key_dim=key_dim, value_dim=value_dim)
    assert out.shape == (B, S, value_dim * head_num)
    max_err = float(jnp.max(jnp.abs(out - ref)))
    # bf16 MXU inputs / bf16 intermediates / bf16 exp -> loosened tolerance vs
    # the pure-f32 reference (expected ~1e-2 level differences).
    assert jnp.allclose(out, ref, atol=5e-2, rtol=5e-2), \
        f"mismatch vs reference (max abs err {max_err})"

    print("KERNEL_OK")
</pallas_src>

<mosaic_0001>
module attributes {stable_mosaic.version = 11 : i64} {
  func.func @_proj_kernel(%arg0: i32, %arg1: i32, %arg2: memref<1x128x32xf32, #tpu.memory_space<vmem>>, %arg3: memref<32x64xbf16, #tpu.memory_space<vmem>>, %arg4: memref<1x64xf32, #tpu.memory_space<vmem>>, %arg5: memref<1x128x32xbf16, #tpu.memory_space<vmem>>, %arg6: memref<1x128x32xbf16, #tpu.memory_space<vmem>>) attributes {dimension_semantics = [#tpu.dimension_semantics<parallel>, #tpu.dimension_semantics<parallel>], iteration_bounds = array<i64: 2, 1>, scalar_prefetch = 0 : i64, scratch_operands = 0 : i64, tpu.core_type = #tpu.core_type<tc>, window_params = [{transform_indices = @transform_0, window_bounds = array<i64: 1, 128, 32>}, {pipeline_mode = #tpu.pipeline_mode<synchronous>, transform_indices = @transform_1, window_bounds = array<i64: 32, 64>}, {pipeline_mode = #tpu.pipeline_mode<synchronous>, transform_indices = @transform_2, window_bounds = array<i64: 1, 64>}, {transform_indices = @transform_3, window_bounds = array<i64: 1, 128, 32>}, {transform_indices = @transform_4, window_bounds = array<i64: 1, 128, 32>}]} {
    %c0 = arith.constant 0 : index
    %c0_0 = arith.constant 0 : index
    %c0_1 = arith.constant 0 : index
    %0 = vector.load %arg2[%c0, %c0_0, %c0_1] : memref<1x128x32xf32, #tpu.memory_space<vmem>>, vector<1x128x32xf32>
    %1 = vector.shape_cast %0 : vector<1x128x32xf32> to vector<128x32xf32>
    %2 = arith.truncf %1 : vector<128x32xf32> to vector<128x32xbf16>
    %c0_2 = arith.constant 0 : index
    %c0_3 = arith.constant 0 : index
    %3 = vector.load %arg3[%c0_2, %c0_3] : memref<32x64xbf16, #tpu.memory_space<vmem>>, vector<32x64xbf16>
    %cst = arith.constant dense<0.000000e+00> : vector<128x64xf32>
    %4 = tpu.matmul %2, %3, %cst {dimension_numbers = #tpu.dot_dimension_numbers<[1], [0], [0], [1], [0, 0, 1, 1], [], []>} : vector<128x32xbf16>, vector<32x64xbf16>, vector<128x64xf32> -> vector<128x64xf32>
    %c0_4 = arith.constant 0 : index
    %c0_5 = arith.constant 0 : index
    %5 = vector.load %arg4[%c0_4, %c0_5] : memref<1x64xf32, #tpu.memory_space<vmem>>, vector<1x64xf32>
    %6 = vector.broadcast %5 : vector<1x64xf32> to vector<128x64xf32>
    %7 = arith.addf %4, %6 : vector<128x64xf32>
    %8 = vector.extract_strided_slice %7 {offsets = [0, 0], sizes = [128, 32], strides = [1, 1]} : vector<128x64xf32> to vector<128x32xf32>
    %cst_6 = arith.constant 0.594603539 : f32
    %9 = vector.broadcast %cst_6 : f32 to vector<128x32xf32>
    %10 = arith.mulf %8, %9 : vector<128x32xf32>
    %11 = arith.truncf %10 : vector<128x32xf32> to vector<128x32xbf16>
    %c0_7 = arith.constant 0 : index
    %c0_8 = arith.constant 0 : index
    %c0_9 = arith.constant 0 : index
    %12 = vector.load %arg5[%c0_7, %c0_8, %c0_9] : memref<1x128x32xbf16, #tpu.memory_space<vmem>>, vector<1x128x32xbf16>
    %13 = vector.shape_cast %12 : vector<1x128x32xbf16> to vector<128x32xbf16>
    %14 = vector.shape_cast %11 : vector<128x32xbf16> to vector<1x128x32xbf16>
    tpu.vector_store %arg5[%c0_7, %c0_8, %c0_9], %14 {strides = array<i32>} : memref<1x128x32xbf16, #tpu.memory_space<vmem>>, vector<1x128x32xbf16>,
    %15 = vector.extract_strided_slice %7 {offsets = [0, 32], sizes = [128, 32], strides = [1, 1]} : vector<128x64xf32> to vector<128x32xf32>
    %16 = arith.truncf %15 : vector<128x32xf32> to vector<128x32xbf16>
    %c0_10 = arith.constant 0 : index
    %c0_11 = arith.constant 0 : index
    %c0_12 = arith.constant 0 : index
    %17 = vector.load %arg6[%c0_10, %c0_11, %c0_12] : memref<1x128x32xbf16, #tpu.memory_space<vmem>>, vector<1x128x32xbf16>
    %18 = vector.shape_cast %17 : vector<1x128x32xbf16> to vector<128x32xbf16>
    %19 = vector.shape_cast %16 : vector<128x32xbf16> to vector<1x128x32xbf16>
    tpu.vector_store %arg6[%c0_10, %c0_11, %c0_12], %19 {strides = array<i32>} : memref<1x128x32xbf16, #tpu.memory_space<vmem>>, vector<1x128x32xbf16>,
    return
  }
  func.func @transform_0(%arg0: i32, %arg1: i32) -> (i32, i32, i32) {
    %c0_i32 = arith.constant 0 : i32
    %c0_i32_0 = arith.constant 0 : i32
    return %arg0, %arg1, %c0_i32 : i32, i32, i32
  }
  func.func @transform_1(%arg0: i32, %arg1: i32) -> (i32, i32) {
    %c0_i32 = arith.constant 0 : i32
    %c0_i32_0 = arith.constant 0 : i32
    %c0_i32_1 = arith.constant 0 : i32
    return %c0_i32, %c0_i32_0 : i32, i32
  }
  func.func @transform_2(%arg0: i32, %arg1: i32) -> (i32, i32) {
    %c0_i32 = arith.constant 0 : i32
    %c0_i32_0 = arith.constant 0 : i32
    %c0_i32_1 = arith.constant 0 : i32
    return %c0_i32, %c0_i32_0 : i32, i32
  }
  func.func @transform_3(%arg0: i32, %arg1: i32) -> (i32, i32, i32) {
    %c0_i32 = arith.constant 0 : i32
    %c0_i32_0 = arith.constant 0 : i32
    return %arg0, %arg1, %c0_i32 : i32, i32, i32
  }
  func.func @transform_4(%arg0: i32, %arg1: i32) -> (i32, i32, i32) {
    %c0_i32 = arith.constant 0 : i32
    %c0_i32_0 = arith.constant 0 : i32
    return %arg0, %arg1, %c0_i32 : i32, i32, i32
  }
}

</mosaic_0001>

<llo_original>
// kernel: tpu_custom_call.1
$region0: #{tpu_custom_call.1}
  #allocation0 [shape = 'u32[]', space=smem, size = 0x4, offset = 0x4, fixed_abs, tag = 'smem constant byte address 0x4 - core index']
  #allocation1 [shape = 'u32[144,128]{1,0:T(1,128)}', space=vmem, size = 0x12000, scoped, tag = 'internal scratch']
  %s0 = inlined_call_operand.vmem [shape: f32[2,128,32], index: 0, kind: input, shape index: {}]
  %s1 = inlined_call_operand.vmem [shape: bf16[32,64], index: 1, kind: input, shape index: {}]
  %s2 = inlined_call_operand.vmem [shape: f32[1,64], index: 2, kind: input, shape index: {}]
  %s3 = inlined_call_operand.vmem [shape: bf16[2,128,32], index: 3, kind: output, shape index: {0}]
  %s4 = inlined_call_operand.vmem [shape: bf16[2,128,32], index: 4, kind: output, shape index: {1}]
  %5 = xla_tuple %s3, %s4
  %s6 = sld [smem:[#allocation0]]
  $region53: #{tpu_custom_call.1} parent=0
    _
  %s8 = ssub.s32 1, %s6
  %s9 = scalar_select 0, %s8, %s6
  loop: start=0, step=1, limit=4
  $region2: #{tpu_custom_call.1} parent=0 // loop_pre_header
    _
  $region3: #{tpu_custom_call.1} parent=0 // loop_header
    %s11 = sphi 0, %s15
    %p12 = scmp.ge.s32.totalorder %s11, 4
    %s18 = sphi 0, %s30
    %s19 = sphi 0, %s26
    %s20 = sphi 0, %s18
    %s21 = sphi 0, %s19
    %s22 = sphi 0, %s20
    %s23 = sphi 0, %s21
    %s35 = sphi 0, %s37
    %s38 = sphi 0, %s35
    %s39 = sphi 0, %s38
    %s55 = sphi 0, %s39
    %s59 = sphi 0, %s59
    %s61 = sphi 0, %s59
    %s62 = sphi 0, %s61
    %s76 = sphi 0, %s62
    %s80 = sphi 0, %s80
    %s82 = sphi 0, %s80
    %s83 = sphi 0, %s82
    %s97 = sphi 0, %s83
    %s105 = sphi 0, %s107
    %s108 = sphi 0, %s105
    %s109 = sphi 0, %s108
    %s125 = sphi 0, %s109
    %s133 = sphi 0, %s135
    %s136 = sphi 0, %s133
    %s137 = sphi 0, %s136
    %s153 = sphi 0, %s137
  $region4: #{tpu_custom_call.1} parent=0 // loop_header_branch
    %14 = sbr.rel (%p12) target = $region8
  $region5: #{tpu_custom_call.1} parent=0 // loop_body
    %s16 = ssub.s32 %s11, 1
    %s17 = ssub.s32 %s11, 2
    %s24 = sadd.s32 1, %s19
    %p25 = scmp.ge.s32.totalorder %s24, 1
    %s26 = scalar_select %p25, 0, %s24
    %s27 = sadd.s32 1, %s18
    %s28 = scalar_select %p25, %s27, %s18
    %p29 = scmp.ge.s32.totalorder %s28, 2
    %s30 = scalar_select %p29, 0, %s28
    %s31 = ssub.s32 %s18, %s30
    %s32 = ssub.s32 %s19, %s26
    %s33 = sor.u32 %s31, %s32
    %p34 = scmp.eq.s32.totalorder %s33, 0
    %s36 = sadd.s32 %s35, 1
    %s37 = scalar_select %p34, %s35, %s36
    %p40 = pneg %p34
    %p41 = scmp.eq.s32.totalorder %s11, 1
    %p42 = por %p40, %p41
    %p43 = scmp.ne.s32.totalorder %s35, %s38
    %p44 = scmp.eq.s32.totalorder %s11, 0
    %p45 = por %p43, %p44
    %p46 = scmp.ne.s32.totalorder %s35, %s38
    %p47 = scmp.eq.s32.totalorder %s16, 1
    %p48 = por %p46, %p47
    %p49 = scmp.ne.s32.totalorder %s38, %s39
    %p50 = scmp.eq.s32.totalorder %s16, 0
    %p51 = por %p49, %p50
    %p52 = scmp.ne.s32.totalorder %s38, %s39
    %p53 = scmp.eq.s32.totalorder %s17, 1
    %p54 = por %p52, %p53
    %p56 = scmp.ne.s32.totalorder %s39, %s55
    %p57 = scmp.eq.s32.totalorder %s17, 0
    %p58 = por %p56, %p57
    %s60 = sadd.s32 %s59, 1
    %p63 = scmp.eq.s32.totalorder %s11, 1
    %p64 = scmp.ne.s32.totalorder %s59, %s61
    %p65 = scmp.eq.s32.totalorder %s11, 0
    %p66 = por %p64, %p65
    %p67 = scmp.ne.s32.totalorder %s59, %s61
    %p68 = scmp.eq.s32.totalorder %s16, 1
    %p69 = por %p67, %p68
    %p70 = scmp.ne.s32.totalorder %s61, %s62
    %p71 = scmp.eq.s32.totalorder %s16, 0
    %p72 = por %p70, %p71
    %p73 = scmp.ne.s32.totalorder %s61, %s62
    %p74 = scmp.eq.s32.totalorder %s17, 1
    %p75 = por %p73, %p74
    %p77 = scmp.ne.s32.totalorder %s62, %s76
    %p78 = scmp.eq.s32.totalorder %s17, 0
    %p79 = por %p77, %p78
    %s81 = sadd.s32 %s80, 1
    %p84 = scmp.eq.s32.totalorder %s11, 1
    %p85 = scmp.ne.s32.totalorder %s80, %s82
    %p86 = scmp.eq.s32.totalorder %s11, 0
    %p87 = por %p85, %p86
    %p88 = scmp.ne.s32.totalorder %s80, %s82
    %p89 = scmp.eq.s32.totalorder %s16, 1
    %p90 = por %p88, %p89
    %p91 = scmp.ne.s32.totalorder %s82, %s83
    %p92 = scmp.eq.s32.totalorder %s16, 0
    %p93 = por %p91, %p92
    %p94 = scmp.ne.s32.totalorder %s82, %s83
    %p95 = scmp.eq.s32.totalorder %s17, 1
    %p96 = por %p94, %p95
    %p98 = scmp.ne.s32.totalorder %s83, %s97
    %p99 = scmp.eq.s32.totalorder %s17, 0
    %p100 = por %p98, %p99
    %s101 = ssub.s32 %s18, %s30
    %s102 = ssub.s32 %s19, %s26
    %s103 = sor.u32 %s101, %s102
    %p104 = scmp.eq.s32.totalorder %s103, 0
    %s106 = sadd.s32 %s105, 1
    %s107 = scalar_select %p104, %s105, %s106
    %p110 = pneg %p104
    %p111 = scmp.eq.s32.totalorder %s11, 1
    %p112 = por %p110, %p111
    %p113 = scmp.ne.s32.totalorder %s105, %s108
    %p114 = scmp.eq.s32.totalorder %s11, 0
    %p115 = por %p113, %p114
    %p116 = scmp.ne.s32.totalorder %s105, %s108
    %p117 = scmp.eq.s32.totalorder %s16, 1
    %p118 = por %p116, %p117
    %p119 = scmp.ne.s32.totalorder %s108, %s109
    %p120 = scmp.eq.s32.totalorder %s16, 0
    %p121 = por %p119, %p120
    %p122 = scmp.ne.s32.totalorder %s108, %s109
    %p123 = scmp.eq.s32.totalorder %s17, 1
    %p124 = por %p122, %p123
    %p126 = scmp.ne.s32.totalorder %s109, %s125
    %p127 = scmp.eq.s32.totalorder %s17, 0
    %p128 = por %p126, %p127
    %s129 = ssub.s32 %s18, %s30
    %s130 = ssub.s32 %s19, %s26
    %s131 = sor.u32 %s129, %s130
    %p132 = scmp.eq.s32.totalorder %s131, 0
    %s134 = sadd.s32 %s133, 1
    %s135 = scalar_select %p132, %s133, %s134
    %p138 = pneg %p132
    %p139 = scmp.eq.s32.totalorder %s11, 1
    %p140 = por %p138, %p139
    %p141 = scmp.ne.s32.totalorder %s133, %s136
    %p142 = scmp.eq.s32.totalorder %s11, 0
    %p143 = por %p141, %p142
    %p144 = scmp.ne.s32.totalorder %s133, %s136
    %p145 = scmp.eq.s32.totalorder %s16, 1
    %p146 = por %p144, %p145
    %p147 = scmp.ne.s32.totalorder %s136, %s137
    %p148 = scmp.eq.s32.totalorder %s16, 0
    %p149 = por %p147, %p148
    %p150 = scmp.ne.s32.totalorder %s136, %s137
    %p151 = scmp.eq.s32.totalorder %s17, 1
    %p152 = por %p150, %p151
    %p154 = scmp.ne.s32.totalorder %s137, %s153
    %p155 = scmp.eq.s32.totalorder %s17, 0
    %p156 = por %p154, %p155
    %p157 = scmp.le.s32.totalorder 1, %s11
    %p158 = scmp.lt.s32.totalorder %s11, 3
    %p159 = pnand %p157, %p158
    %p160 = pneg %p159
    // Predicated region
    $region9: #{tpu_custom_call.1} parent=5 // pred_check
      _
    $region10: #{tpu_custom_call.1} parent=5 // pred_check_branch
      %162 = sbr.rel (%p159) target = $region12
    $region11: #{tpu_custom_call.1} parent=5 // pred_region
      %s163 = ssub.s32 %s11, 1
      // Predicated region
      $region13: #{tpu_custom_call.1} parent=11 // pred_check
        %p164 = pneg %p72
      $region14: #{tpu_custom_call.1} parent=11 // pred_check_branch
        %166 = sbr.rel (%p164) target = $region16
      $region15: #{tpu_custom_call.1} parent=11 // pred_region
        _
      $region16: #{tpu_custom_call.1} parent=11 // pred_fallthru
        _
      // Predicated region
      $region17: #{tpu_custom_call.1} parent=11 // pred_check
        %p167 = pneg %p93
      $region18: #{tpu_custom_call.1} parent=11 // pred_check_branch
        %169 = sbr.rel (%p167) target = $region20
      $region19: #{tpu_custom_call.1} parent=11 // pred_region
        _
      $region20: #{tpu_custom_call.1} parent=11 // pred_fallthru
        _
    $region12: #{tpu_custom_call.1} parent=5 // pred_fallthru
      _
    %p170 = scmp.lt.s32.totalorder %s11, 2
    // Predicated region
    $region21: #{tpu_custom_call.1} parent=5 // pred_check
      %p171 = pneg %p170
    $region22: #{tpu_custom_call.1} parent=5 // pred_check_branch
      %173 = sbr.rel (%p171) target = $region24
    $region23: #{tpu_custom_call.1} parent=5 // pred_region
      // Predicated region
      $region25: #{tpu_custom_call.1} parent=23 // pred_check
        %p174 = pneg %p45
      $region26: #{tpu_custom_call.1} parent=23 // pred_check_branch
        %176 = sbr.rel (%p174) target = $region28
      $region27: #{tpu_custom_call.1} parent=23 // pred_region
        %s177 = smul.u32 16, %s19
        %p178 = scmp.lt.s32.totalorder %s18, 1
        %s179 = scalar_select %p178, %s18, 1
        %p180 = scmp.lt.s32.totalorder %s177, 15
        %s181 = scalar_select %p180, %s177, 15
        %s182 = smul.addr %s179, 16
        %s183 = sadd.s32 %s181, %s182
        %s184 = smul.addr %s183, 8
        %s185 = scalar_lea.vmem %s0, %s184
        %s186 = smul.u32 16, %s19
      $region28: #{tpu_custom_call.1} parent=23 // pred_fallthru
        _
    $region24: #{tpu_custom_call.1} parent=5 // pred_fallthru
      _
    %p187 = scmp.le.s32.totalorder 1, %s11
    %p188 = scmp.lt.s32.totalorder %s11, 3
    %p189 = pnand %p187, %p188
    %p190 = pneg %p189
    // Predicated region
    $region29: #{tpu_custom_call.1} parent=5 // pred_check
      _
    $region30: #{tpu_custom_call.1} parent=5 // pred_check_branch
      %192 = sbr.rel (%p189) target = $region32
    $region31: #{tpu_custom_call.1} parent=5 // pred_region
      %s193 = ssub.s32 %s11, 1
      %s194 = smul.u32 16, %s21
      %p195 = scmp.lt.s32.totalorder %s20, 1
      %s196 = scalar_select %p195, %s20, 1
      %p197 = scmp.lt.s32.totalorder %s194, 15
      %s198 = scalar_select %p197, %s194, 15
      %s199 = smul.addr %s196, 16
      %s200 = sadd.s32 %s198, %s199
      %s201 = smul.addr %s200, 8
      %s202 = scalar_lea.vmem %s0, %s201
      %p203 = pneg %p51
      %p204 = pneg %p48
      %p205 = pneg %p72
      %p206 = pneg %p69
      %p207 = pneg %p93
      %p208 = pneg %p90
      %p209 = pneg %p121
      %p210 = pneg %p118
      %s211 = smul.u32 16, %s21
      %p212 = scmp.lt.s32.totalorder %s20, 1
      %s213 = scalar_select %p212, %s20, 1
      %p214 = scmp.lt.s32.totalorder %s211, 15
      %s215 = scalar_select %p214, %s211, 15
      %s216 = smul.addr %s213, 16
      %s217 = sadd.s32 %s215, %s216
      %s218 = smul.addr %s217, 4
      %s219 = scalar_lea.vmem %s3, %s218
      %p220 = pneg %p149
      %p221 = pneg %p146
      %s222 = smul.u32 16, %s21
      %p223 = scmp.lt.s32.totalorder %s20, 1
      %s224 = scalar_select %p223, %s20, 1
      %p225 = scmp.lt.s32.totalorder %s222, 15
      %s226 = scalar_select %p225, %s222, 15
      %s227 = smul.addr %s224, 16
      %s228 = sadd.s32 %s226, %s227
      %s229 = smul.addr %s228, 4
      %s230 = scalar_lea.vmem %s4, %s229
      %s231 = smul.u32 16, %s21
      %p232 = scmp.lt.s32.totalorder %s20, 1
      %s233 = scalar_select %p232, %s20, 1
      %p234 = scmp.lt.s32.totalorder %s231, 15
      %s235 = scalar_select %p234, %s231, 15
      %s236 = smul.addr %s233, 16
      %s237 = sadd.s32 %s235, %s236
      %s238 = smul.addr %s237, 8
      %s239 = scalar_lea.vmem %s0, %s238
      %s240 = smul.u32 16, %s21
      %s241 = smul.u32 16, %s21
      %p242 = scmp.lt.s32.totalorder %s20, 1
      %s243 = scalar_select %p242, %s20, 1
      %p244 = scmp.lt.s32.totalorder %s241, 15
      %s245 = scalar_select %p244, %s241, 15
      %s246 = smul.addr %s243, 16
      %s247 = sadd.s32 %s245, %s246
      %s248 = smul.addr %s247, 4
      %s249 = scalar_lea.vmem %s3, %s248
      %s250 = smul.u32 16, %s21
      %s251 = smul.u32 16, %s21
      %p252 = scmp.lt.s32.totalorder %s20, 1
      %s253 = scalar_select %p252, %s20, 1
      %p254 = scmp.lt.s32.totalorder %s251, 15
      %s255 = scalar_select %p254, %s251, 15
      %s256 = smul.addr %s253, 16
      %s257 = sadd.s32 %s255, %s256
      %s258 = smul.addr %s257, 4
      %s259 = scalar_lea.vmem %s4, %s258
      %s260 = smul.u32 16, %s21
      %v262 = vld [vmem:[%s239] sm:$0xff]
      %v263 = vld [vmem:[%s239 + $0x8] sm:$0xff]
      %v264 = vld [vmem:[%s239 + $0x10] sm:$0xff]
      %v265 = vld [vmem:[%s239 + $0x18] sm:$0xff]
      %v266 = vld [vmem:[%s239 + $0x20] sm:$0xff]
      %v267 = vld [vmem:[%s239 + $0x28] sm:$0xff]
      %v268 = vld [vmem:[%s239 + $0x30] sm:$0xff]
      %v269 = vld [vmem:[%s239 + $0x38] sm:$0xff]
      %v270 = vld [vmem:[%s239 + $0x40] sm:$0xff]
      %v271 = vld [vmem:[%s239 + $0x48] sm:$0xff]
      %v272 = vld [vmem:[%s239 + $0x50] sm:$0xff]
      %v273 = vld [vmem:[%s239 + $0x58] sm:$0xff]
      %v274 = vld [vmem:[%s239 + $0x60] sm:$0xff]
      %v275 = vld [vmem:[%s239 + $0x68] sm:$0xff]
      %v276 = vld [vmem:[%s239 + $0x70] sm:$0xff]
      %v277 = vld [vmem:[%s239 + $0x78] sm:$0xff]
      %v278 = vpack.c.bf16 %v263, %v262
      %v279 = vpack.c.bf16 %v265, %v264
      %v280 = vpack.c.bf16 %v267, %v266
      %v281 = vpack.c.bf16 %v269, %v268
      %v282 = vpack.c.bf16 %v271, %v270
      %v283 = vpack.c.bf16 %v273, %v272
      %v284 = vpack.c.bf16 %v275, %v274
      %v285 = vpack.c.bf16 %v277, %v276
      %v286 = vld [vmem:[%s1] sm:$0xf]
      %v287 = vld [vmem:[%s1 + $0x4] sm:$0xf]
      %v288 = vld [vmem:[%s1 + $0x8] sm:$0xf]
      %v289 = vld [vmem:[%s1 + $0xc] sm:$0xf]
      %v290 = vld [vmem:[%s2] sm:$0x1]
      %v292 = vlaneseq
      %v293 = vshrl.u32 %v292, 7
      %v294 = vsub.s32 0, %v293
      %v295 = vrot.slane %v290, %v294
      %v301 = vunpack.c.l.b16 %v286
      %v302 = vunpack.c.l.b16 %v287
      %v303 = vunpack.c.l.b16 %v288
      %v304 = vunpack.c.l.b16 %v289
      %v305 = vpack.c.b16 %v302, %v301
      %v306 = vpack.c.b16 %v304, %v303
      %vm309 = vcmask 261120
      %v311 = vsel %vm309, %v278, 0
      %v314 = vsel %vm309, %v279, 0
      %v317 = vsel %vm309, %v280, 0
      %v320 = vsel %vm309, %v281, 0
      %v323 = vsel %vm309, %v282, 0
      %v326 = vsel %vm309, %v283, 0
      %v329 = vsel %vm309, %v284, 0
      %v332 = vsel %vm309, %v285, 0
      %334 = vmatprep.subr.bf16.mxu0 0
      %335 = vmatpush1.bf16.msra.mxu0 %v305
      %336 = vmatprep.subr.bf16.mxu0 0
      %337 = vmatpush1.bf16.msra.mxu0 %v306
      %338 = vmatprep.subr.bf16.mxu0 0
      %339 = vmatpush1.bf16.msra.mxu0 0
      %340 = vmatprep.subr.bf16.mxu0 0
      %341 = vmatpush1.bf16.msra.mxu0 0
      %342 = vmatprep.subr.bf16.mxu0 0
      %343 = vmatpush1.bf16.msra.mxu0 0
      %344 = vmatprep.subr.bf16.mxu0 0
      %345 = vmatpush1.bf16.msra.mxu0 0
      %346 = vmatprep.subr.bf16.mxu0 0
      %347 = vmatpush1.bf16.msra.mxu0 0
      %348 = vmatprep.subr.bf16.mxu0 0
      %349 = vmatpush1.bf16.msra.mxu0 0
      %350 = vmatprep.subr.bf16.mxu0 0
      %351 = vmatpush1.bf16.msra.mxu0 0
      %352 = vmatprep.subr.bf16.mxu0 0
      %353 = vmatpush1.bf16.msra.mxu0 0
      %354 = vmatprep.subr.bf16.mxu0 0
      %355 = vmatpush1.bf16.msra.mxu0 0
      %356 = vmatprep.subr.bf16.mxu0 0
      %357 = vmatpush1.bf16.msra.mxu0 0
      %358 = vmatprep.subr.bf16.mxu0 0
      %359 = vmatpush1.bf16.msra.mxu0 0
      %360 = vmatprep.subr.bf16.mxu0 0
      %361 = vmatpush1.bf16.msra.mxu0 0
      %362 = vmatprep.subr.bf16.mxu0 0
      %363 = vmatpush1.bf16.msra.mxu0 0
      %364 = vmatprep.subr.bf16.mxu0 0
      %365 = vmatpush1.bf16.msra.mxu0 0
      %366 = vmatprep.mubr.bf16.mxu0 0
      %367 = vmatmul.mubr.bf16.gmra.mrb[0].mxu0 %v311
      %v368 = vpop.f32.mrb[0].mxu0
      %v369 = vadd.f32 %v295, %v368
      %v370 = vpop.f32.mrb[0].mxu0
      %v371 = vpop.f32.mrb[0].mxu0
      %v372 = vadd.f32 %v295, %v371
      %v373 = vpop.f32.mrb[0].mxu0
      %374 = vmatprep.mubr.bf16.mxu0 0
      %375 = vmatmul.mubr.bf16.gmra.mrb[0].mxu0 %v314
      %v376 = vpop.f32.mrb[0].mxu0
      %v377 = vadd.f32 %v295, %v376
      %v378 = vpop.f32.mrb[0].mxu0
      %v379 = vpop.f32.mrb[0].mxu0
      %v380 = vadd.f32 %v295, %v379
      %v381 = vpop.f32.mrb[0].mxu0
      %382 = vmatprep.mubr.bf16.mxu0 0
      %383 = vmatmul.mubr.bf16.gmra.mrb[0].mxu0 %v317
      %v384 = vpop.f32.mrb[0].mxu0
      %v385 = vadd.f32 %v295, %v384
      %v386 = vpop.f32.mrb[0].mxu0
      %v387 = vpop.f32.mrb[0].mxu0
      %v388 = vadd.f32 %v295, %v387
      %v389 = vpop.f32.mrb[0].mxu0
      %390 = vmatprep.mubr.bf16.mxu0 0
      %391 = vmatmul.mubr.bf16.gmra.mrb[0].mxu0 %v320
      %v392 = vpop.f32.mrb[0].mxu0
      %v393 = vadd.f32 %v295, %v392
      %v394 = vpop.f32.mrb[0].mxu0
      %v395 = vpop.f32.mrb[0].mxu0
      %v396 = vadd.f32 %v295, %v395
      %v397 = vpop.f32.mrb[0].mxu0
      %398 = vmatprep.mubr.bf16.mxu0 0
      %399 = vmatmul.mubr.bf16.gmra.mrb[0].mxu0 %v323
      %v400 = vpop.f32.mrb[0].mxu0
      %v401 = vadd.f32 %v295, %v400
      %v402 = vpop.f32.mrb[0].mxu0
      %v403 = vpop.f32.mrb[0].mxu0
      %v404 = vadd.f32 %v295, %v403
      %v405 = vpop.f32.mrb[0].mxu0
      %406 = vmatprep.mubr.bf16.mxu0 0
      %407 = vmatmul.mubr.bf16.gmra.mrb[0].mxu0 %v326
      %v408 = vpop.f32.mrb[0].mxu0
      %v409 = vadd.f32 %v295, %v408
      %v410 = vpop.f32.mrb[0].mxu0
      %v411 = vpop.f32.mrb[0].mxu0
      %v412 = vadd.f32 %v295, %v411
      %v413 = vpop.f32.mrb[0].mxu0
      %414 = vmatprep.mubr.bf16.mxu0 0
      %415 = vmatmul.mubr.bf16.gmra.mrb[0].mxu0 %v329
      %v416 = vpop.f32.mrb[0].mxu0
      %v417 = vadd.f32 %v295, %v416
      %v418 = vpop.f32.mrb[0].mxu0
      %v419 = vpop.f32.mrb[0].mxu0
      %v420 = vadd.f32 %v295, %v419
      %v421 = vpop.f32.mrb[0].mxu0
      %422 = vmatprep.mubr.bf16.mxu0 0
      %423 = vmatmul.mubr.bf16.gmra.mrb[0].mxu0 %v332
      %v424 = vpop.f32.mrb[0].mxu0
      %v425 = vadd.f32 %v295, %v424
      %v426 = vpop.f32.mrb[0].mxu0
      %v427 = vpop.f32.mrb[0].mxu0
      %v428 = vadd.f32 %v295, %v427
      %v429 = vpop.f32.mrb[0].mxu0
      %430 = vdwg.mxu0
      %v431 = vmul.f32 %v369, 0.59460354
      %v432 = vmul.f32 %v372, 0.59460354
      %v433 = vmul.f32 %v377, 0.59460354
      %v434 = vmul.f32 %v380, 0.59460354
      %v435 = vmul.f32 %v385, 0.59460354
      %v436 = vmul.f32 %v388, 0.59460354
      %v437 = vmul.f32 %v393, 0.59460354
      %v438 = vmul.f32 %v396, 0.59460354
      %v439 = vmul.f32 %v401, 0.59460354
      %v440 = vmul.f32 %v404, 0.59460354
      %v441 = vmul.f32 %v409, 0.59460354
      %v442 = vmul.f32 %v412, 0.59460354
      %v443 = vmul.f32 %v417, 0.59460354
      %v444 = vmul.f32 %v420, 0.59460354
      %v445 = vmul.f32 %v425, 0.59460354
      %v446 = vmul.f32 %v428, 0.59460354
      %v447 = vpack.c.bf16 %v432, %v431
      %v448 = vpack.c.bf16 %v434, %v433
      %v449 = vpack.c.bf16 %v436, %v435
      %v450 = vpack.c.bf16 %v438, %v437
      %v451 = vpack.c.bf16 %v440, %v439
      %v452 = vpack.c.bf16 %v442, %v441
      %v453 = vpack.c.bf16 %v444, %v443
      %v454 = vpack.c.bf16 %v446, %v445
      %v463 = vunpack.c.l.b16 %v447
      %v464 = vunpack.c.h.b16 %v447
      %v465 = vunpack.c.l.b16 %v448
      %v466 = vunpack.c.h.b16 %v448
      %v467 = vunpack.c.l.b16 %v449
      %v468 = vunpack.c.h.b16 %v449
      %v469 = vunpack.c.l.b16 %v450
      %v470 = vunpack.c.h.b16 %v450
      %v471 = vunpack.c.l.b16 %v451
      %v472 = vunpack.c.h.b16 %v451
      %v473 = vunpack.c.l.b16 %v452
      %v474 = vunpack.c.h.b16 %v452
      %v475 = vunpack.c.l.b16 %v453
      %v476 = vunpack.c.h.b16 %v453
      %v477 = vunpack.c.l.b16 %v454
      %v478 = vunpack.c.h.b16 %v454
      %v479 = vpack.c.b16 %v463, %v463
      %v480 = vpack.c.b16 %v464, %v464
      %v481 = vpack.c.b16 %v465, %v465
      %v482 = vpack.c.b16 %v466, %v466
      %v483 = vpack.c.b16 %v467, %v467
      %v484 = vpack.c.b16 %v468, %v468
      %v485 = vpack.c.b16 %v469, %v469
      %v486 = vpack.c.b16 %v470, %v470
      %v487 = vpack.c.b16 %v471, %v471
      %v488 = vpack.c.b16 %v472, %v472
      %v489 = vpack.c.b16 %v473, %v473
      %v490 = vpack.c.b16 %v474, %v474
      %v491 = vpack.c.b16 %v475, %v475
      %v492 = vpack.c.b16 %v476, %v476
      %v493 = vpack.c.b16 %v477, %v477
      %v494 = vpack.c.b16 %v478, %v478
      %vm511 = vcmask 257024
      %512 = vst.msk [vmem:[%s249] sm:$0xf] %vm511, %v479
      %513 = vst.msk [vmem:[%s249 + $0x4] sm:$0xf] %vm511, %v480
      %514 = vst.msk [vmem:[%s249 + $0x8] sm:$0xf] %vm511, %v481
      %515 = vst.msk [vmem:[%s249 + $0xc] sm:$0xf] %vm511, %v482
      %516 = vst.msk [vmem:[%s249 + $0x10] sm:$0xf] %vm511, %v483
      %517 = vst.msk [vmem:[%s249 + $0x14] sm:$0xf] %vm511, %v484
      %518 = vst.msk [vmem:[%s249 + $0x18] sm:$0xf] %vm511, %v485
      %519 = vst.msk [vmem:[%s249 + $0x1c] sm:$0xf] %vm511, %v486
      %520 = vst.msk [vmem:[%s249 + $0x20] sm:$0xf] %vm511, %v487
      %521 = vst.msk [vmem:[%s249 + $0x24] sm:$0xf] %vm511, %v488
      %522 = vst.msk [vmem:[%s249 + $0x28] sm:$0xf] %vm511, %v489
      %523 = vst.msk [vmem:[%s249 + $0x2c] sm:$0xf] %vm511, %v490
      %524 = vst.msk [vmem:[%s249 + $0x30] sm:$0xf] %vm511, %v491
      %525 = vst.msk [vmem:[%s249 + $0x34] sm:$0xf] %vm511, %v492
      %526 = vst.msk [vmem:[%s249 + $0x38] sm:$0xf] %vm511, %v493
      %527 = vst.msk [vmem:[%s249 + $0x3c] sm:$0xf] %vm511, %v494
      %v528 = vpack.c.bf16 %v372, %v369
      %v529 = vpack.c.bf16 %v380, %v377
      %v530 = vpack.c.bf16 %v388, %v385
      %v531 = vpack.c.bf16 %v396, %v393
      %v532 = vpack.c.bf16 %v404, %v401
      %v533 = vpack.c.bf16 %v412, %v409
      %v534 = vpack.c.bf16 %v420, %v417
      %v535 = vpack.c.bf16 %v428, %v425
      %v544 = vunpack.c.l.b16 %v528
      %v545 = vunpack.c.h.b16 %v528
      %v546 = vunpack.c.l.b16 %v529
      %v547 = vunpack.c.h.b16 %v529
      %v548 = vunpack.c.l.b16 %v530
      %v549 = vunpack.c.h.b16 %v530
      %v550 = vunpack.c.l.b16 %v531
      %v551 = vunpack.c.h.b16 %v531
      %v552 = vunpack.c.l.b16 %v532
      %v553 = vunpack.c.h.b16 %v532
      %v554 = vunpack.c.l.b16 %v533
      %v555 = vunpack.c.h.b16 %v533
      %v556 = vunpack.c.l.b16 %v534
      %v557 = vunpack.c.h.b16 %v534
      %v558 = vunpack.c.l.b16 %v535
      %v559 = vunpack.c.h.b16 %v535
      %v560 = vpack.c.b16 %v544, %v544
      %v561 = vpack.c.b16 %v545, %v545
      %v562 = vpack.c.b16 %v546, %v546
      %v563 = vpack.c.b16 %v547, %v547
      %v564 = vpack.c.b16 %v548, %v548
      %v565 = vpack.c.b16 %v549, %v549
      %v566 = vpack.c.b16 %v550, %v550
      %v567 = vpack.c.b16 %v551, %v551
      %v568 = vpack.c.b16 %v552, %v552
      %v569 = vpack.c.b16 %v553, %v553
      %v570 = vpack.c.b16 %v554, %v554
      %v571 = vpack.c.b16 %v555, %v555
      %v572 = vpack.c.b16 %v556, %v556
      %v573 = vpack.c.b16 %v557, %v557
      %v574 = vpack.c.b16 %v558, %v558
      %v575 = vpack.c.b16 %v559, %v559
      %576 = vrot.lane.b32.xlu0 %v560, 96
      %v577 = vpop.permute.xlu0 %576
      %578 = vrot.lane.b32.xlu0 %v561, 96
      %v579 = vpop.permute.xlu0 %578
      %580 = vrot.lane.b32.xlu0 %v562, 96
      %v581 = vpop.permute.xlu0 %580
      %582 = vrot.lane.b32.xlu0 %v563, 96
      %v583 = vpop.permute.xlu0 %582
      %584 = vrot.lane.b32.xlu0 %v564, 96
      %v585 = vpop.permute.xlu0 %584
      %586 = vrot.lane.b32.xlu0 %v565, 96
      %v587 = vpop.permute.xlu0 %586
      %588 = vrot.lane.b32.xlu0 %v566, 96
      %v589 = vpop.permute.xlu0 %588
      %590 = vrot.lane.b32.xlu0 %v567, 96
      %v591 = vpop.permute.xlu0 %590
      %592 = vrot.lane.b32.xlu0 %v568, 96
      %v593 = vpop.permute.xlu0 %592
      %594 = vrot.lane.b32.xlu0 %v569, 96
      %v595 = vpop.permute.xlu0 %594
      %596 = vrot.lane.b32.xlu0 %v570, 96
      %v597 = vpop.permute.xlu0 %596
      %598 = vrot.lane.b32.xlu0 %v571, 96
      %v599 = vpop.permute.xlu0 %598
      %600 = vrot.lane.b32.xlu0 %v572, 96
      %v601 = vpop.permute.xlu0 %600
      %602 = vrot.lane.b32.xlu0 %v573, 96
      %v603 = vpop.permute.xlu0 %602
      %604 = vrot.lane.b32.xlu0 %v574, 96
      %v605 = vpop.permute.xlu0 %604
      %606 = vrot.lane.b32.xlu0 %v575, 96
      %v607 = vpop.permute.xlu0 %606
      %624 = vst.msk [vmem:[%s259] sm:$0xf] %vm511, %v577
      %625 = vst.msk [vmem:[%s259 + $0x4] sm:$0xf] %vm511, %v579
      %626 = vst.msk [vmem:[%s259 + $0x8] sm:$0xf] %vm511, %v581
      %627 = vst.msk [vmem:[%s259 + $0xc] sm:$0xf] %vm511, %v583
      %628 = vst.msk [vmem:[%s259 + $0x10] sm:$0xf] %vm511, %v585
      %629 = vst.msk [vmem:[%s259 + $0x14] sm:$0xf] %vm511, %v587
      %630 = vst.msk [vmem:[%s259 + $0x18] sm:$0xf] %vm511, %v589
      %631 = vst.msk [vmem:[%s259 + $0x1c] sm:$0xf] %vm511, %v591
      %632 = vst.msk [vmem:[%s259 + $0x20] sm:$0xf] %vm511, %v593
      %633 = vst.msk [vmem:[%s259 + $0x24] sm:$0xf] %vm511, %v595
      %634 = vst.msk [vmem:[%s259 + $0x28] sm:$0xf] %vm511, %v597
      %635 = vst.msk [vmem:[%s259 + $0x2c] sm:$0xf] %vm511, %v599
      %636 = vst.msk [vmem:[%s259 + $0x30] sm:$0xf] %vm511, %v601
      %637 = vst.msk [vmem:[%s259 + $0x34] sm:$0xf] %vm511, %v603
      %638 = vst.msk [vmem:[%s259 + $0x38] sm:$0xf] %vm511, %v605
      %639 = vst.msk [vmem:[%s259 + $0x3c] sm:$0xf] %vm511, %v607
      %s640 = smul.u32 16, %s21
      %p641 = scmp.lt.s32.totalorder %s20, 1
      %s642 = scalar_select %p641, %s20, 1
      %p643 = scmp.lt.s32.totalorder %s640, 15
      %s644 = scalar_select %p643, %s640, 15
      %s645 = smul.addr %s642, 16
      %s646 = sadd.s32 %s644, %s645
      %s647 = smul.addr %s646, 4
      %s648 = scalar_lea.vmem %s3, %s647
      %s649 = smul.u32 16, %s21
      %p650 = scmp.lt.s32.totalorder %s20, 1
      %s651 = scalar_select %p650, %s20, 1
      %p652 = scmp.lt.s32.totalorder %s649, 15
      %s653 = scalar_select %p652, %s649, 15
      %s654 = smul.addr %s651, 16
      %s655 = sadd.s32 %s653, %s654
      %s656 = smul.addr %s655, 4
      %s657 = scalar_lea.vmem %s4, %s656
      // Predicated region
      $region33: #{tpu_custom_call.1} parent=31 // pred_check
        %p658 = pneg %p118
      $region34: #{tpu_custom_call.1} parent=31 // pred_check_branch
        %660 = sbr.rel (%p658) target = $region36
      $region35: #{tpu_custom_call.1} parent=31 // pred_region
        %s661 = smul.u32 16, %s21
      $region36: #{tpu_custom_call.1} parent=31 // pred_fallthru
        _
      // Predicated region
      $region37: #{tpu_custom_call.1} parent=31 // pred_check
        %p662 = pneg %p146
      $region38: #{tpu_custom_call.1} parent=31 // pred_check_branch
        %664 = sbr.rel (%p662) target = $region40
      $region39: #{tpu_custom_call.1} parent=31 // pred_region
        %s665 = smul.u32 16, %s21
      $region40: #{tpu_custom_call.1} parent=31 // pred_fallthru
        _
    $region32: #{tpu_custom_call.1} parent=5 // pred_fallthru
      _
    %p666 = scmp.le.s32.totalorder 2, %s11
    // Predicated region
    $region41: #{tpu_custom_call.1} parent=5 // pred_check
      %p667 = pneg %p666
    $region42: #{tpu_custom_call.1} parent=5 // pred_check_branch
      %669 = sbr.rel (%p667) target = $region44
    $region43: #{tpu_custom_call.1} parent=5 // pred_region
      %s670 = ssub.s32 %s11, 2
      // Predicated region
      $region45: #{tpu_custom_call.1} parent=43 // pred_check
        %p671 = pneg %p124
      $region46: #{tpu_custom_call.1} parent=43 // pred_check_branch
        %673 = sbr.rel (%p671) target = $region48
      $region47: #{tpu_custom_call.1} parent=43 // pred_region
        %s674 = smul.u32 16, %s23
        %p675 = scmp.lt.s32.totalorder %s22, 1
        %s676 = scalar_select %p675, %s22, 1
        %p677 = scmp.lt.s32.totalorder %s674, 15
        %s678 = scalar_select %p677, %s674, 15
        %s679 = smul.addr %s676, 16
        %s680 = sadd.s32 %s678, %s679
        %s681 = smul.addr %s680, 4
        %s682 = scalar_lea.vmem %s3, %s681
      $region48: #{tpu_custom_call.1} parent=43 // pred_fallthru
        _
      // Predicated region
      $region49: #{tpu_custom_call.1} parent=43 // pred_check
        %p683 = pneg %p152
      $region50: #{tpu_custom_call.1} parent=43 // pred_check_branch
        %685 = sbr.rel (%p683) target = $region52
      $region51: #{tpu_custom_call.1} parent=43 // pred_region
        %s686 = smul.u32 16, %s23
        %p687 = scmp.lt.s32.totalorder %s22, 1
        %s688 = scalar_select %p687, %s22, 1
        %p689 = scmp.lt.s32.totalorder %s686, 15
        %s690 = scalar_select %p689, %s686, 15
        %s691 = smul.addr %s688, 16
        %s692 = sadd.s32 %s690, %s691
        %s693 = smul.addr %s692, 4
        %s694 = scalar_lea.vmem %s4, %s693
      $region52: #{tpu_custom_call.1} parent=43 // pred_fallthru
        _
    $region44: #{tpu_custom_call.1} parent=5 // pred_fallthru
      _
  $region6: #{tpu_custom_call.1} parent=0 // loop_footer
    %s15 = sadd.s32 1, %s11
  $region7: #{tpu_custom_call.1} parent=0 // loop_footer_branch
    %10 = sbr.rel target = $region3
  $region8: #{tpu_custom_call.1} parent=0 // loop_exit
    _

</llo_original>
